<compile_context>
chip_gen: v5e
topology: v5e:2x2
jax: 0.10.0
libtpu: 0.0.40
codegen_flags: <defaults>
</compile_context>

<pallas_src>
import numpy as np
from collections import Counter

import jax
import jax.numpy as jnp
from jax.experimental import pallas as pl
from jax.experimental.pallas import tpu as pltpu

# ----------------------------------------------------------------------------
# Synthetic stand-ins for the module's config (small shapes).
# ----------------------------------------------------------------------------
OUTPUT_SIZE = (16, 16)          # (crop_w, crop_h)
PATCH_SIZE = 8                  # attn_model.config.patch_size
PROC_H, PROC_W = 32, 32         # processed (pixel_values) spatial size
NUM_LAYERS = 4                  # attn_model.config.num_hidden_layers
NUM_HEADS = 4
K_TOP_PATCHES = 3               # ATTN_CROP_K_TOP_PATCHES_DEFAULT
NUM_EARLY_LAYERS = 2            # ATTN_CROP_NUM_EARLY_LAYERS_TO_AGGREGATE_DEFAULT
NUM_HIGHLIGHT_LAYERS = 3        # ATTN_CROP_NUM_HIGHLIGHT_LAYERS_DEFAULT
NUM_TOP_CENTROID = 4            # ATTN_CROP_NUM_TOP_CENTROID_PATCHES_DEFAULT

NUM_PATCHES_H = PROC_H // PATCH_SIZE
NUM_PATCHES_W = PROC_W // PATCH_SIZE
NUM_PATCHES = NUM_PATCHES_H * NUM_PATCHES_W     # P = 16
SEQ = NUM_PATCHES + 1                           # CLS + patches = 17

N_EARLY_EFF = min(NUM_EARLY_LAYERS, NUM_LAYERS)
N_HIGHLIGHT_EFF = min(NUM_HIGHLIGHT_LAYERS, NUM_LAYERS)
K_EFF = min(K_TOP_PATCHES, NUM_PATCHES)

LANE_PAD = 128                  # lane-dense output width

RAW_H, RAW_W = 36, 40           # "raw PIL image" size (H, W)


# ----------------------------------------------------------------------------
# Pallas kernel: single invocation.
#   in : attn_ref (L, H, SEQ, SEQ)  -- full (toy-sized) attention tensor
#   out: out_ref  (L+1, 128)        -- lane-dense slab:
#        rows 0..L-1 = per-layer head-mean of the CLS query row,
#        row  L      = mean of the first N_EARLY_EFF per-layer rows.
#        Lane 0 is the CLS->CLS column, lanes 1..P the patch scores,
#        lanes >= SEQ are zero padding (sliced off on the host).
# ----------------------------------------------------------------------------
def cls_attn_kernel(attn_ref, out_ref):
    out_ref[...] = jnp.zeros_like(out_ref)          # zero the padding lanes

    inv_h = 1.0 / NUM_HEADS
    rows = []
    for l in range(NUM_LAYERS):                     # static, fully unrolled
        acc = attn_ref[l, 0, 0:1, :]                # (1, SEQ) CLS query row
        for h in range(1, NUM_HEADS):
            acc = acc + attn_ref[l, h, 0:1, :]
        rows.append(acc * inv_h)                    # head-mean, (1, SEQ)

    agg = rows[0]
    for l in range(1, N_EARLY_EFF):
        agg = agg + rows[l]
    rows.append(agg * (1.0 / N_EARLY_EFF))          # early-layer mean

    for i, row in enumerate(rows):                  # L+1 single-vreg stores
        out_ref[i:i + 1, 0:SEQ] = row


@jax.jit
def attention_stats(attentions):
    """attentions [L,H,SEQ,SEQ] -> (per_layer [L,P], aggregated [P],
    topk_idx [N_HIGHLIGHT_EFF, K_EFF]) in a single device dispatch."""
    attn_f32 = attentions.astype(jnp.float32)
    slab = pl.pallas_call(
        cls_attn_kernel,
        out_shape=jax.ShapeDtypeStruct((NUM_LAYERS + 1, LANE_PAD), jnp.float32),
        grid_spec=pltpu.PrefetchScalarGridSpec(
            num_scalar_prefetch=0,
            grid=(1,),
            in_specs=[pl.BlockSpec((NUM_LAYERS, NUM_HEADS, SEQ, SEQ),
                                   lambda i: (0, 0, 0, 0))],
            out_specs=pl.BlockSpec((NUM_LAYERS + 1, LANE_PAD),
                                   lambda i: (0, 0)),
        ),
        compiler_params=pltpu.CompilerParams(
            dimension_semantics=("arbitrary",)),
    )(attn_f32)

    per_layer = slab[:NUM_LAYERS, 1:1 + NUM_PATCHES]      # (L, P)
    aggregated = slab[NUM_LAYERS, 1:1 + NUM_PATCHES]      # (P,)
    # Batched top-k over the highlight layers -- same device call as the kernel.
    _, topk_idx = jax.lax.top_k(per_layer[:N_HIGHLIGHT_EFF], K_EFF)
    return per_layer, aggregated, topk_idx


# ----------------------------------------------------------------------------
# Host-side glue reproducing the rest of AttentionCrop.forward semantics.
# ----------------------------------------------------------------------------
def attention_crop_forward(raw_image, attentions):
    """raw_image: CHW float array [3, RAW_H, RAW_W].
       attentions: [L, H, S, S] float32 (softmaxed attention maps)."""
    # One dispatch, one host transfer.
    per_layer, aggregated, topk_idx = jax.device_get(
        attention_stats(attentions))
    per_layer = np.asarray(per_layer)
    aggregated = np.asarray(aggregated)
    topk_idx = np.asarray(topk_idx)

    # TODO(synk): Counter-based highlight counting and the lexicographic
    # (count, score) sort are scalar/host logic with no clean Pallas
    # equivalent; kept on host (the top-k itself is batched on device above).
    patch_highlight_counts = Counter()
    for layer_row in topk_idx:
        for p_idx in layer_row:
            patch_highlight_counts[int(p_idx)] += 1

    highlighted = list(patch_highlight_counts.keys())
    sorted_patches = sorted(
        highlighted,
        key=lambda p: (patch_highlight_counts[p], float(aggregated[p])),
        reverse=True)
    patches_for_centroid = sorted_patches[:NUM_TOP_CENTROID]

    # Softmax-weighted centroid of patch centers (tiny, host-side).
    scores = np.array([aggregated[p] for p in patches_for_centroid],
                      dtype=np.float32)
    mn, mx = scores.min(), scores.max()
    if (mx - mn) < 1e-6:
        norm = np.zeros_like(scores)
    else:
        norm = (scores - mn) / (mx - mn)
    e = np.exp(norm - norm.max())
    weights = e / e.sum()

    center_x_resized, center_y_resized = PROC_W / 2.0, PROC_H / 2.0
    if weights.size > 0 and weights.sum() > 1e-6:
        wx = wy = sw = 0.0
        for i, p in enumerate(patches_for_centroid):
            pr, pc = p // NUM_PATCHES_W, p % NUM_PATCHES_W
            cx, cy = (pc + 0.5) * PATCH_SIZE, (pr + 0.5) * PATCH_SIZE
            w = float(weights[i])
            wx += cx * w
            wy += cy * w
            sw += w
        if sw > 1e-6:
            center_x_resized, center_y_resized = wx / sw, wy / sw

    # Map centroid back to raw image coords and clamp the crop box.
    scale_x, scale_y = RAW_W / PROC_W, RAW_H / PROC_H
    cx_orig, cy_orig = center_x_resized * scale_x, center_y_resized * scale_y
    crop_w, crop_h = OUTPUT_SIZE
    x0, y0 = cx_orig - crop_w / 2.0, cy_orig - crop_h / 2.0
    x0, y0 = max(0.0, x0), max(0.0, y0)
    if x0 + crop_w > RAW_W:
        x0 = float(RAW_W - crop_w)
    if y0 + crop_h > RAW_H:
        y0 = float(RAW_H - crop_h)
    x0, y0 = max(0.0, x0), max(0.0, y0)
    fx0, fy0 = int(round(x0)), int(round(y0))
    fx1, fy1 = fx0 + crop_w, fy0 + crop_h
    fx1, fy1 = min(fx1, RAW_W), min(fy1, RAW_H)
    fx0, fy0 = max(0, fx1 - crop_w), max(0, fy1 - crop_h)

    # Integer crop (CHW).  TODO(synk): PIL LANCZOS resize fallback has no
    # Pallas equivalent; with an in-bounds integer crop the sizes already match.
    cropped = raw_image[:, fy0:fy1, fx0:fx1]
    return cropped, (fx0, fy0, fx1, fy1), per_layer, aggregated


if __name__ == "__main__":
    key = jax.random.PRNGKey(0)
    k_attn, k_img = jax.random.split(key)

    # Synthetic attention maps (deterministic): softmax over the key axis,
    # matching shape convention [layers, heads, seq, seq] of CLIP attentions.
    logits = jax.random.normal(k_attn, (NUM_LAYERS, NUM_HEADS, SEQ, SEQ),
                               dtype=jnp.float32)
    attentions = jax.nn.softmax(logits, axis=-1)

    # Synthetic "raw image" (CHW float).
    raw_image = np.asarray(
        jax.random.uniform(k_img, (3, RAW_H, RAW_W), dtype=jnp.float32))

    cropped, box, per_layer, aggregated = attention_crop_forward(
        raw_image, attentions)

    # Numpy reference check of the Pallas hot path.
    cls_np = np.asarray(attentions)[:, :, 0, 1:]                  # [L, H, P]
    per_layer_ref = cls_np.mean(axis=1)                           # [L, P]
    agg_ref = per_layer_ref[:N_EARLY_EFF].mean(axis=0)            # [P]
    assert np.allclose(per_layer, per_layer_ref, atol=1e-5)
    assert np.allclose(aggregated, agg_ref, atol=1e-5)
    assert cropped.shape == (3, OUTPUT_SIZE[1], OUTPUT_SIZE[0])
    assert box[2] - box[0] == OUTPUT_SIZE[0] and box[3] - box[1] == OUTPUT_SIZE[1]

    jax.block_until_ready(jnp.asarray(cropped))
    print("KERNEL_OK")
</pallas_src>

<mosaic_0001>
module attributes {stable_mosaic.version = 11 : i64} {
  func.func @cls_attn_kernel(%arg0: i32, %arg1: memref<4x4x17x17xf32, #tpu.memory_space<vmem>>, %arg2: memref<5x128xf32, #tpu.memory_space<vmem>>) attributes {dimension_semantics = [#tpu.dimension_semantics<arbitrary>], iteration_bounds = array<i64: 1>, scalar_prefetch = 0 : i64, scratch_operands = 0 : i64, tpu.core_type = #tpu.core_type<tc>, window_params = [{pipeline_mode = #tpu.pipeline_mode<synchronous>, transform_indices = @transform_0, window_bounds = array<i64: 4, 4, 17, 17>}, {pipeline_mode = #tpu.pipeline_mode<synchronous>, transform_indices = @transform_1, window_bounds = array<i64: 5, 128>}]} {
    %cst = arith.constant 0.000000e+00 : f32
    %0 = vector.broadcast %cst : f32 to vector<5x128xf32>
    %c0 = arith.constant 0 : index
    %c0_0 = arith.constant 0 : index
    %1 = vector.load %arg2[%c0, %c0_0] : memref<5x128xf32, #tpu.memory_space<vmem>>, vector<5x128xf32>
    tpu.vector_store %arg2[%c0, %c0_0], %0 {strides = array<i32>} : memref<5x128xf32, #tpu.memory_space<vmem>>, vector<5x128xf32>,
    %c0_1 = arith.constant 0 : index
    %c0_2 = arith.constant 0 : index
    %c0_3 = arith.constant 0 : index
    %c0_4 = arith.constant 0 : index
    %2 = vector.load %arg1[%c0_1, %c0_2, %c0_3, %c0_4] : memref<4x4x17x17xf32, #tpu.memory_space<vmem>>, vector<1x1x1x17xf32>
    %3 = vector.shape_cast %2 : vector<1x1x1x17xf32> to vector<1x17xf32>
    %c0_5 = arith.constant 0 : index
    %c1 = arith.constant 1 : index
    %c0_6 = arith.constant 0 : index
    %c0_7 = arith.constant 0 : index
    %4 = vector.load %arg1[%c0_5, %c1, %c0_6, %c0_7] : memref<4x4x17x17xf32, #tpu.memory_space<vmem>>, vector<1x1x1x17xf32>
    %5 = vector.shape_cast %4 : vector<1x1x1x17xf32> to vector<1x17xf32>
    %6 = arith.addf %3, %5 : vector<1x17xf32>
    %c0_8 = arith.constant 0 : index
    %c2 = arith.constant 2 : index
    %c0_9 = arith.constant 0 : index
    %c0_10 = arith.constant 0 : index
    %7 = vector.load %arg1[%c0_8, %c2, %c0_9, %c0_10] : memref<4x4x17x17xf32, #tpu.memory_space<vmem>>, vector<1x1x1x17xf32>
    %8 = vector.shape_cast %7 : vector<1x1x1x17xf32> to vector<1x17xf32>
    %9 = arith.addf %6, %8 : vector<1x17xf32>
    %c0_11 = arith.constant 0 : index
    %c3 = arith.constant 3 : index
    %c0_12 = arith.constant 0 : index
    %c0_13 = arith.constant 0 : index
    %10 = vector.load %arg1[%c0_11, %c3, %c0_12, %c0_13] : memref<4x4x17x17xf32, #tpu.memory_space<vmem>>, vector<1x1x1x17xf32>
    %11 = vector.shape_cast %10 : vector<1x1x1x17xf32> to vector<1x17xf32>
    %12 = arith.addf %9, %11 : vector<1x17xf32>
    %cst_14 = arith.constant 2.500000e-01 : f32
    %13 = vector.broadcast %cst_14 : f32 to vector<1x17xf32>
    %14 = arith.mulf %12, %13 : vector<1x17xf32>
    %c1_15 = arith.constant 1 : index
    %c0_16 = arith.constant 0 : index
    %c0_17 = arith.constant 0 : index
    %c0_18 = arith.constant 0 : index
    %15 = vector.load %arg1[%c1_15, %c0_16, %c0_17, %c0_18] : memref<4x4x17x17xf32, #tpu.memory_space<vmem>>, vector<1x1x1x17xf32>
    %16 = vector.shape_cast %15 : vector<1x1x1x17xf32> to vector<1x17xf32>
    %c1_19 = arith.constant 1 : index
    %c1_20 = arith.constant 1 : index
    %c0_21 = arith.constant 0 : index
    %c0_22 = arith.constant 0 : index
    %17 = vector.load %arg1[%c1_19, %c1_20, %c0_21, %c0_22] : memref<4x4x17x17xf32, #tpu.memory_space<vmem>>, vector<1x1x1x17xf32>
    %18 = vector.shape_cast %17 : vector<1x1x1x17xf32> to vector<1x17xf32>
    %19 = arith.addf %16, %18 : vector<1x17xf32>
    %c1_23 = arith.constant 1 : index
    %c2_24 = arith.constant 2 : index
    %c0_25 = arith.constant 0 : index
    %c0_26 = arith.constant 0 : index
    %20 = vector.load %arg1[%c1_23, %c2_24, %c0_25, %c0_26] : memref<4x4x17x17xf32, #tpu.memory_space<vmem>>, vector<1x1x1x17xf32>
    %21 = vector.shape_cast %20 : vector<1x1x1x17xf32> to vector<1x17xf32>
    %22 = arith.addf %19, %21 : vector<1x17xf32>
    %c1_27 = arith.constant 1 : index
    %c3_28 = arith.constant 3 : index
    %c0_29 = arith.constant 0 : index
    %c0_30 = arith.constant 0 : index
    %23 = vector.load %arg1[%c1_27, %c3_28, %c0_29, %c0_30] : memref<4x4x17x17xf32, #tpu.memory_space<vmem>>, vector<1x1x1x17xf32>
    %24 = vector.shape_cast %23 : vector<1x1x1x17xf32> to vector<1x17xf32>
    %25 = arith.addf %22, %24 : vector<1x17xf32>
    %cst_31 = arith.constant 2.500000e-01 : f32
    %26 = vector.broadcast %cst_31 : f32 to vector<1x17xf32>
    %27 = arith.mulf %25, %26 : vector<1x17xf32>
    %c2_32 = arith.constant 2 : index
    %c0_33 = arith.constant 0 : index
    %c0_34 = arith.constant 0 : index
    %c0_35 = arith.constant 0 : index
    %28 = vector.load %arg1[%c2_32, %c0_33, %c0_34, %c0_35] : memref<4x4x17x17xf32, #tpu.memory_space<vmem>>, vector<1x1x1x17xf32>
    %29 = vector.shape_cast %28 : vector<1x1x1x17xf32> to vector<1x17xf32>
    %c2_36 = arith.constant 2 : index
    %c1_37 = arith.constant 1 : index
    %c0_38 = arith.constant 0 : index
    %c0_39 = arith.constant 0 : index
    %30 = vector.load %arg1[%c2_36, %c1_37, %c0_38, %c0_39] : memref<4x4x17x17xf32, #tpu.memory_space<vmem>>, vector<1x1x1x17xf32>
    %31 = vector.shape_cast %30 : vector<1x1x1x17xf32> to vector<1x17xf32>
    %32 = arith.addf %29, %31 : vector<1x17xf32>
    %c2_40 = arith.constant 2 : index
    %c2_41 = arith.constant 2 : index
    %c0_42 = arith.constant 0 : index
    %c0_43 = arith.constant 0 : index
    %33 = vector.load %arg1[%c2_40, %c2_41, %c0_42, %c0_43] : memref<4x4x17x17xf32, #tpu.memory_space<vmem>>, vector<1x1x1x17xf32>
    %34 = vector.shape_cast %33 : vector<1x1x1x17xf32> to vector<1x17xf32>
    %35 = arith.addf %32, %34 : vector<1x17xf32>
    %c2_44 = arith.constant 2 : index
    %c3_45 = arith.constant 3 : index
    %c0_46 = arith.constant 0 : index
    %c0_47 = arith.constant 0 : index
    %36 = vector.load %arg1[%c2_44, %c3_45, %c0_46, %c0_47] : memref<4x4x17x17xf32, #tpu.memory_space<vmem>>, vector<1x1x1x17xf32>
    %37 = vector.shape_cast %36 : vector<1x1x1x17xf32> to vector<1x17xf32>
    %38 = arith.addf %35, %37 : vector<1x17xf32>
    %cst_48 = arith.constant 2.500000e-01 : f32
    %39 = vector.broadcast %cst_48 : f32 to vector<1x17xf32>
    %40 = arith.mulf %38, %39 : vector<1x17xf32>
    %c3_49 = arith.constant 3 : index
    %c0_50 = arith.constant 0 : index
    %c0_51 = arith.constant 0 : index
    %c0_52 = arith.constant 0 : index
    %41 = vector.load %arg1[%c3_49, %c0_50, %c0_51, %c0_52] : memref<4x4x17x17xf32, #tpu.memory_space<vmem>>, vector<1x1x1x17xf32>
    %42 = vector.shape_cast %41 : vector<1x1x1x17xf32> to vector<1x17xf32>
    %c3_53 = arith.constant 3 : index
    %c1_54 = arith.constant 1 : index
    %c0_55 = arith.constant 0 : index
    %c0_56 = arith.constant 0 : index
    %43 = vector.load %arg1[%c3_53, %c1_54, %c0_55, %c0_56] : memref<4x4x17x17xf32, #tpu.memory_space<vmem>>, vector<1x1x1x17xf32>
    %44 = vector.shape_cast %43 : vector<1x1x1x17xf32> to vector<1x17xf32>
    %45 = arith.addf %42, %44 : vector<1x17xf32>
    %c3_57 = arith.constant 3 : index
    %c2_58 = arith.constant 2 : index
    %c0_59 = arith.constant 0 : index
    %c0_60 = arith.constant 0 : index
    %46 = vector.load %arg1[%c3_57, %c2_58, %c0_59, %c0_60] : memref<4x4x17x17xf32, #tpu.memory_space<vmem>>, vector<1x1x1x17xf32>
    %47 = vector.shape_cast %46 : vector<1x1x1x17xf32> to vector<1x17xf32>
    %48 = arith.addf %45, %47 : vector<1x17xf32>
    %c3_61 = arith.constant 3 : index
    %c3_62 = arith.constant 3 : index
    %c0_63 = arith.constant 0 : index
    %c0_64 = arith.constant 0 : index
    %49 = vector.load %arg1[%c3_61, %c3_62, %c0_63, %c0_64] : memref<4x4x17x17xf32, #tpu.memory_space<vmem>>, vector<1x1x1x17xf32>
    %50 = vector.shape_cast %49 : vector<1x1x1x17xf32> to vector<1x17xf32>
    %51 = arith.addf %48, %50 : vector<1x17xf32>
    %cst_65 = arith.constant 2.500000e-01 : f32
    %52 = vector.broadcast %cst_65 : f32 to vector<1x17xf32>
    %53 = arith.mulf %51, %52 : vector<1x17xf32>
    %54 = arith.addf %14, %27 : vector<1x17xf32>
    %cst_66 = arith.constant 5.000000e-01 : f32
    %55 = vector.broadcast %cst_66 : f32 to vector<1x17xf32>
    %56 = arith.mulf %54, %55 : vector<1x17xf32>
    %c0_67 = arith.constant 0 : index
    %c0_68 = arith.constant 0 : index
    %57 = vector.load %arg2[%c0_67, %c0_68] : memref<5x128xf32, #tpu.memory_space<vmem>>, vector<1x17xf32>
    tpu.vector_store %arg2[%c0_67, %c0_68], %14 {strides = array<i32>} : memref<5x128xf32, #tpu.memory_space<vmem>>, vector<1x17xf32>,
    %c1_69 = arith.constant 1 : index
    %c0_70 = arith.constant 0 : index
    %58 = vector.load %arg2[%c1_69, %c0_70] : memref<5x128xf32, #tpu.memory_space<vmem>>, vector<1x17xf32>
    tpu.vector_store %arg2[%c1_69, %c0_70], %27 {strides = array<i32>} : memref<5x128xf32, #tpu.memory_space<vmem>>, vector<1x17xf32>,
    %c2_71 = arith.constant 2 : index
    %c0_72 = arith.constant 0 : index
    %59 = vector.load %arg2[%c2_71, %c0_72] : memref<5x128xf32, #tpu.memory_space<vmem>>, vector<1x17xf32>
    tpu.vector_store %arg2[%c2_71, %c0_72], %40 {strides = array<i32>} : memref<5x128xf32, #tpu.memory_space<vmem>>, vector<1x17xf32>,
    %c3_73 = arith.constant 3 : index
    %c0_74 = arith.constant 0 : index
    %60 = vector.load %arg2[%c3_73, %c0_74] : memref<5x128xf32, #tpu.memory_space<vmem>>, vector<1x17xf32>
    tpu.vector_store %arg2[%c3_73, %c0_74], %53 {strides = array<i32>} : memref<5x128xf32, #tpu.memory_space<vmem>>, vector<1x17xf32>,
    %c4 = arith.constant 4 : index
    %c0_75 = arith.constant 0 : index
    %61 = vector.load %arg2[%c4, %c0_75] : memref<5x128xf32, #tpu.memory_space<vmem>>, vector<1x17xf32>
    tpu.vector_store %arg2[%c4, %c0_75], %56 {strides = array<i32>} : memref<5x128xf32, #tpu.memory_space<vmem>>, vector<1x17xf32>,
    return
  }
  func.func @transform_0(%arg0: i32) -> (i32, i32, i32, i32) {
    %c0_i32 = arith.constant 0 : i32
    %c0_i32_0 = arith.constant 0 : i32
    %c0_i32_1 = arith.constant 0 : i32
    %c0_i32_2 = arith.constant 0 : i32
    %c0_i32_3 = arith.constant 0 : i32
    return %c0_i32, %c0_i32_0, %c0_i32_1, %c0_i32_2 : i32, i32, i32, i32
  }
  func.func @transform_1(%arg0: i32) -> (i32, i32) {
    %c0_i32 = arith.constant 0 : i32
    %c0_i32_0 = arith.constant 0 : i32
    %c0_i32_1 = arith.constant 0 : i32
    return %c0_i32, %c0_i32_0 : i32, i32
  }
}

</mosaic_0001>

<llo_original>
// kernel: attention_stats.1
$region0: #{attention_stats.1}
  #allocation0 [shape = 'u32[]', space=smem, size = 0x4, offset = 0x4, fixed_abs, tag = 'smem constant byte address 0x4 - core index']
  #allocation1 [shape = 'u32[72,128]{1,0:T(1,128)}', space=vmem, size = 0x9000, scoped, tag = 'internal scratch']
  %s0 = inlined_call_operand.vmem [shape: f32[4,4,17,17], index: 0, kind: input, shape index: {}]
  %s1 = inlined_call_operand.vmem [shape: f32[5,128], index: 1, kind: output, shape index: {}]
  %s2 = sld [smem:[#allocation0]]
  $region14: #{attention_stats.1} parent=0
    _
  %s4 = ssub.s32 1, %s2
  %s5 = scalar_select 0, %s4, %s2
  // Predicated region
  $region2: #{attention_stats.1} parent=0 // pred_check
    _
  $region3: #{attention_stats.1} parent=0 // pred_check_branch
    %7 = sbr.rel (0) target = $region5
  $region4: #{attention_stats.1} parent=0 // pred_region
    _
  $region5: #{attention_stats.1} parent=0 // pred_fallthru
    _
  %8 = vst [vmem:[%s1] sm:$0x1f] 0.0
  %v9 = vld [vmem:[%s0] sm:$0x1]
  %s10 = scalar_lea.vmem %s0, 24
  %v11 = vld [vmem:[%s10] sm:$0x1]
  %v12 = vadd.f32 %v9, %v11
  %s13 = scalar_lea.vmem %s0, 48
  %v14 = vld [vmem:[%s13] sm:$0x1]
  %v15 = vadd.f32 %v12, %v14
  %s16 = scalar_lea.vmem %s0, 72
  %v17 = vld [vmem:[%s16] sm:$0x1]
  %v18 = vadd.f32 %v15, %v17
  %v19 = vmul.f32 %v18, 0.25
  %s20 = scalar_lea.vmem %s0, 96
  %v21 = vld [vmem:[%s20] sm:$0x1]
  %s22 = scalar_lea.vmem %s0, 120
  %v23 = vld [vmem:[%s22] sm:$0x1]
  %v24 = vadd.f32 %v21, %v23
  %s25 = scalar_lea.vmem %s0, 144
  %v26 = vld [vmem:[%s25] sm:$0x1]
  %v27 = vadd.f32 %v24, %v26
  %s28 = scalar_lea.vmem %s0, 168
  %v29 = vld [vmem:[%s28] sm:$0x1]
  %v30 = vadd.f32 %v27, %v29
  %v31 = vmul.f32 %v30, 0.25
  %s32 = scalar_lea.vmem %s0, 192
  %v33 = vld [vmem:[%s32] sm:$0x1]
  %s34 = scalar_lea.vmem %s0, 216
  %v35 = vld [vmem:[%s34] sm:$0x1]
  %v36 = vadd.f32 %v33, %v35
  %s37 = scalar_lea.vmem %s0, 240
  %v38 = vld [vmem:[%s37] sm:$0x1]
  %v39 = vadd.f32 %v36, %v38
  %s40 = scalar_lea.vmem %s0, 264
  %v41 = vld [vmem:[%s40] sm:$0x1]
  %v42 = vadd.f32 %v39, %v41
  %v43 = vmul.f32 %v42, 0.25
  %s44 = scalar_lea.vmem %s0, 288
  %v45 = vld [vmem:[%s44] sm:$0x1]
  %s46 = scalar_lea.vmem %s0, 312
  %v47 = vld [vmem:[%s46] sm:$0x1]
  %v48 = vadd.f32 %v45, %v47
  %s49 = scalar_lea.vmem %s0, 336
  %v50 = vld [vmem:[%s49] sm:$0x1]
  %v51 = vadd.f32 %v48, %v50
  %s52 = scalar_lea.vmem %s0, 360
  %v53 = vld [vmem:[%s52] sm:$0x1]
  %v54 = vadd.f32 %v51, %v53
  %v55 = vmul.f32 %v54, 0.25
  %v56 = vadd.f32 %v19, %v31
  %v57 = vmul.f32 %v56, 0.5
  %vm58 = vcmask 131072
  %59 = vst.msk [vmem:[%s1] sm:$0x1] %vm58, %v19
  %60 = vst.msk [vmem:[%s1 + $0x1] sm:$0x1] %vm58, %v31
  %61 = vst.msk [vmem:[%s1 + $0x2] sm:$0x1] %vm58, %v43
  %62 = vst.msk [vmem:[%s1 + $0x3] sm:$0x1] %vm58, %v55
  %63 = vst.msk [vmem:[%s1 + $0x4] sm:$0x1] %vm58, %v57
  // Predicated region
  $region6: #{attention_stats.1} parent=0 // pred_check
    _
  $region7: #{attention_stats.1} parent=0 // pred_check_branch
    %65 = sbr.rel (0) target = $region9
  $region8: #{attention_stats.1} parent=0 // pred_region
    _
  $region9: #{attention_stats.1} parent=0 // pred_fallthru
    _
  // Predicated region
  $region10: #{attention_stats.1} parent=0 // pred_check
    _
  $region11: #{attention_stats.1} parent=0 // pred_check_branch
    %67 = sbr.rel (0) target = $region13
  $region12: #{attention_stats.1} parent=0 // pred_region
    _
  $region13: #{attention_stats.1} parent=0 // pred_fallthru
    _

</llo_original>
